<compile_context>
chip_gen: v7x
topology: tpu7x:2x2x1
jax: 0.10.0
libtpu: 0.0.40
codegen_flags: <defaults>
</compile_context>

<pallas_src>
import functools

import jax
import jax.numpy as jnp
from jax.experimental import pallas as pl
from jax.experimental.pallas import tpu as pltpu


def _lateral_block_kernel(x_ref, m1_ref, bb1_ref, m2_ref, bb2_ref, o_ref, *, H, W):
    # x_ref  : (B*C, H*W)        VMEM  packed NCHW activations (lane axis = H*W)
    # m*_ref : (B*C, K_pad)      VMEM  block-diagonal channel-mix matrix per conv
    # bb*_ref: (B*C, 1)          VMEM  per-conv bias replicated over batch rows
    # o_ref  : (B*C, H*W)        VMEM
    R, HW = x_ref.shape
    f32 = jnp.float32

    # Flat pixel coordinates, shared by every tap of both convs.
    pos = jax.lax.broadcasted_iota(jnp.int32, (1, HW), 1)
    if (W & (W - 1)) == 0:
        col = pos & (W - 1)          # W is a power of two: division-free
    else:
        col = pos % W

    # 3x3 taps in ky-major / kx-minor (HWIO) order: flat lane shift + boundary
    # mask (virtual zero halo).  Masks are built once and reused by both convs.
    taps = []
    for oy in (-1, 0, 1):
        for ox in (-1, 0, 1):
            conds = []
            if oy < 0:
                conds.append(pos >= (-oy) * W)        # h + oy >= 0
            if oy > 0:
                conds.append(pos < (H - oy) * W)      # h + oy < H
            if ox < 0:
                conds.append(col >= -ox)              # w + ox >= 0
            if ox > 0:
                conds.append(col < W - ox)            # w + ox < W
            if conds:
                valid = conds[0]
                for cnd in conds[1:]:
                    valid = valid & cnd
                mask = jnp.where(valid, 1.0, 0.0).astype(f32)   # (1, HW)
            else:
                mask = None  # center tap: always in bounds
            taps.append((oy * W + ox, mask))

    def conv3x3(act, m_ref, bb_ref):
        # act: (R, HW) f32, already activated.  Returns (R, HW) f32.
        cols = []
        for d, mask in taps:
            s = act if d == 0 else jnp.roll(act, -d, axis=-1)   # XLU lane roll
            if mask is not None:
                s = s * mask                                    # zero halo
            cols.append(s)
        k_used = 9 * R
        k_total = m_ref.shape[1]
        if k_total > k_used:                                    # pad contraction
            cols.append(jnp.zeros((k_total - k_used, HW), f32))  # to native 128
        patches = jnp.concatenate(cols, axis=0)                 # (K_pad, HW), in vregs
        out = jnp.dot(m_ref[...], patches,                      # MXU channel mix
                      preferred_element_type=f32)               # (R, HW)
        return out + bb_ref[...]                                # lane-broadcast bias

    # Lane-dense packed load; everything below stays in registers.
    x = x_ref[...].astype(f32)
    h = conv3x3(jnp.maximum(x, 0.0), m1_ref, bb1_ref)           # ReLU -> conv1
    h = conv3x3(jnp.maximum(h, 0.0), m2_ref, bb2_ref)           # ReLU -> conv2
    o_ref[...] = (h + x).astype(o_ref.dtype)                    # residual, lane-dense store


def _pack_mix_matrix(w_hwio, B, C):
    """(3,3,C,C) HWIO conv weights -> (B*C, K_pad) block-diag mixing matrix.

    Row r = b*C + co, applied to the im2col slab whose row t*B*C + b'*C + ci
    holds tap t of input channel ci of batch image b', reproduces
      out[b, co] = sum_{t, ci} w[t, ci, co] * shifted_t[b, ci].
    The contraction dim is zero-padded to a multiple of 128 lanes.
    """
    w = w_hwio.astype(jnp.float32).reshape(9, C, C)             # [tap, ci, co]
    eye_b = jnp.eye(B, dtype=jnp.float32)
    blocks = [jnp.kron(eye_b, jnp.transpose(w[t])) for t in range(9)]
    m = jnp.concatenate(blocks, axis=1)                         # (B*C, 9*B*C)
    k = m.shape[1]
    k_pad = ((k + 127) // 128) * 128
    if k_pad != k:
        m = jnp.pad(m, ((0, 0), (0, k_pad - k)))
    return m


@jax.jit
def lateral_block(x_nchw, w1, b1, w2, b2):
    """x_nchw: (B, C, H, W) f32; conv weights HWIO (3, 3, C, C); biases (C,)."""
    B, C, H, W = x_nchw.shape
    x_flat = x_nchw.reshape(B * C, H * W)   # contiguous reshape: no data movement

    m1 = _pack_mix_matrix(w1, B, C)
    m2 = _pack_mix_matrix(w2, B, C)
    bb1 = jnp.tile(b1.astype(jnp.float32), B).reshape(B * C, 1)
    bb2 = jnp.tile(b2.astype(jnp.float32), B).reshape(B * C, 1)

    vmem = pl.BlockSpec(memory_space=pltpu.MemorySpace.VMEM)
    out_flat = pl.pallas_call(
        functools.partial(_lateral_block_kernel, H=H, W=W),
        out_shape=jax.ShapeDtypeStruct((B * C, H * W), x_nchw.dtype),
        in_specs=[vmem, vmem, vmem, vmem, vmem],
        out_specs=vmem,
    )(x_flat, m1, bb1, m2, bb2)
    return out_flat.reshape(B, C, H, W)


def reference_forward(x_nchw, w1, b1, w2, b2):
    """Pure-JAX reference (lax conv, full f32 precision) for correctness checking."""
    dn = ('NHWC', 'HWIO', 'NHWC')
    hp = jax.lax.Precision.HIGHEST
    x = jnp.transpose(x_nchw, (0, 2, 3, 1))
    h = jnp.maximum(x, 0.0)
    h = jax.lax.conv_general_dilated(h, w1, (1, 1), 'SAME',
                                     dimension_numbers=dn, precision=hp) + b1
    h = jnp.maximum(h, 0.0)
    h = jax.lax.conv_general_dilated(h, w2, (1, 1), 'SAME',
                                     dimension_numbers=dn, precision=hp) + b2
    y = h + x
    return jnp.transpose(y, (0, 3, 1, 2))


if __name__ == "__main__":
    B, C, H, W = 2, 4, 16, 16  # dim = 4

    key = jax.random.PRNGKey(0)
    kx, kw1, kb1, kw2, kb2 = jax.random.split(key, 5)

    x = jax.random.normal(kx, (B, C, H, W), dtype=jnp.float32)
    # Deterministic synthetic parameters (HWIO layout), scaled like a typical init.
    w1 = jax.random.normal(kw1, (3, 3, C, C), dtype=jnp.float32) * 0.1
    b1 = jax.random.normal(kb1, (C,), dtype=jnp.float32) * 0.1
    w2 = jax.random.normal(kw2, (3, 3, C, C), dtype=jnp.float32) * 0.1
    b2 = jax.random.normal(kb2, (C,), dtype=jnp.float32) * 0.1

    out = jax.block_until_ready(lateral_block(x, w1, b1, w2, b2))
    ref = jax.block_until_ready(reference_forward(x, w1, b1, w2, b2))

    assert out.shape == (B, C, H, W)
    # Tolerance covers possible reduced-precision MXU passes for the f32 dot;
    # structural errors would show up as O(0.1 .. 1) mismatches.
    assert jnp.allclose(out, ref, rtol=1e-3, atol=1e-2), "Pallas output mismatch vs reference"

    print("KERNEL_OK")
</pallas_src>

<mosaic_0001>
module attributes {stable_mosaic.version = 11 : i64} {
  func.func @_lateral_block_kernel(%arg0: memref<8x256xf32, #tpu.memory_space<vmem>>, %arg1: memref<8x128xf32, #tpu.memory_space<vmem>>, %arg2: memref<8x1xf32, #tpu.memory_space<vmem>>, %arg3: memref<8x128xf32, #tpu.memory_space<vmem>>, %arg4: memref<8x1xf32, #tpu.memory_space<vmem>>, %arg5: memref<8x256xf32, #tpu.memory_space<vmem>>) attributes {dimension_semantics = [], scalar_prefetch = 0 : i64, scratch_operands = 0 : i64, tpu.core_type = #tpu.core_type<tc>} {
    %0 = tpu.iota {dimensions = array<i32: 1>} : vector<1x256xi32>
    %c15_i32 = arith.constant 15 : i32
    %1 = vector.broadcast %c15_i32 : i32 to vector<1x256xi32>
    %2 = arith.andi %0, %1 : vector<1x256xi32>
    %c16_i32 = arith.constant 16 : i32
    %3 = vector.broadcast %c16_i32 : i32 to vector<1x256xi32>
    %4 = arith.cmpi sge, %0, %3 : vector<1x256xi32>
    %c1_i32 = arith.constant 1 : i32
    %5 = vector.broadcast %c1_i32 : i32 to vector<1x256xi32>
    %6 = arith.cmpi sge, %2, %5 : vector<1x256xi32>
    %7 = arith.andi %4, %6 : vector<1x256xi1>
    %cst = arith.constant 1.000000e+00 : f32
    %cst_0 = arith.constant 0.000000e+00 : f32
    %8 = vector.broadcast %cst : f32 to vector<1x256xf32>
    %9 = vector.broadcast %cst_0 : f32 to vector<1x256xf32>
    %10 = arith.select %7, %8, %9 : vector<1x256xi1>, vector<1x256xf32>
    %c16_i32_1 = arith.constant 16 : i32
    %11 = vector.broadcast %c16_i32_1 : i32 to vector<1x256xi32>
    %12 = arith.cmpi sge, %0, %11 : vector<1x256xi32>
    %cst_2 = arith.constant 1.000000e+00 : f32
    %cst_3 = arith.constant 0.000000e+00 : f32
    %13 = vector.broadcast %cst_2 : f32 to vector<1x256xf32>
    %14 = vector.broadcast %cst_3 : f32 to vector<1x256xf32>
    %15 = arith.select %12, %13, %14 : vector<1x256xi1>, vector<1x256xf32>
    %c16_i32_4 = arith.constant 16 : i32
    %16 = vector.broadcast %c16_i32_4 : i32 to vector<1x256xi32>
    %17 = arith.cmpi sge, %0, %16 : vector<1x256xi32>
    %c15_i32_5 = arith.constant 15 : i32
    %18 = vector.broadcast %c15_i32_5 : i32 to vector<1x256xi32>
    %19 = arith.cmpi slt, %2, %18 : vector<1x256xi32>
    %20 = arith.andi %17, %19 : vector<1x256xi1>
    %cst_6 = arith.constant 1.000000e+00 : f32
    %cst_7 = arith.constant 0.000000e+00 : f32
    %21 = vector.broadcast %cst_6 : f32 to vector<1x256xf32>
    %22 = vector.broadcast %cst_7 : f32 to vector<1x256xf32>
    %23 = arith.select %20, %21, %22 : vector<1x256xi1>, vector<1x256xf32>
    %c1_i32_8 = arith.constant 1 : i32
    %24 = vector.broadcast %c1_i32_8 : i32 to vector<1x256xi32>
    %25 = arith.cmpi sge, %2, %24 : vector<1x256xi32>
    %cst_9 = arith.constant 1.000000e+00 : f32
    %cst_10 = arith.constant 0.000000e+00 : f32
    %26 = vector.broadcast %cst_9 : f32 to vector<1x256xf32>
    %27 = vector.broadcast %cst_10 : f32 to vector<1x256xf32>
    %28 = arith.select %25, %26, %27 : vector<1x256xi1>, vector<1x256xf32>
    %c15_i32_11 = arith.constant 15 : i32
    %29 = vector.broadcast %c15_i32_11 : i32 to vector<1x256xi32>
    %30 = arith.cmpi slt, %2, %29 : vector<1x256xi32>
    %cst_12 = arith.constant 1.000000e+00 : f32
    %cst_13 = arith.constant 0.000000e+00 : f32
    %31 = vector.broadcast %cst_12 : f32 to vector<1x256xf32>
    %32 = vector.broadcast %cst_13 : f32 to vector<1x256xf32>
    %33 = arith.select %30, %31, %32 : vector<1x256xi1>, vector<1x256xf32>
    %c240_i32 = arith.constant 240 : i32
    %34 = vector.broadcast %c240_i32 : i32 to vector<1x256xi32>
    %35 = arith.cmpi slt, %0, %34 : vector<1x256xi32>
    %c1_i32_14 = arith.constant 1 : i32
    %36 = vector.broadcast %c1_i32_14 : i32 to vector<1x256xi32>
    %37 = arith.cmpi sge, %2, %36 : vector<1x256xi32>
    %38 = arith.andi %35, %37 : vector<1x256xi1>
    %cst_15 = arith.constant 1.000000e+00 : f32
    %cst_16 = arith.constant 0.000000e+00 : f32
    %39 = vector.broadcast %cst_15 : f32 to vector<1x256xf32>
    %40 = vector.broadcast %cst_16 : f32 to vector<1x256xf32>
    %41 = arith.select %38, %39, %40 : vector<1x256xi1>, vector<1x256xf32>
    %c240_i32_17 = arith.constant 240 : i32
    %42 = vector.broadcast %c240_i32_17 : i32 to vector<1x256xi32>
    %43 = arith.cmpi slt, %0, %42 : vector<1x256xi32>
    %cst_18 = arith.constant 1.000000e+00 : f32
    %cst_19 = arith.constant 0.000000e+00 : f32
    %44 = vector.broadcast %cst_18 : f32 to vector<1x256xf32>
    %45 = vector.broadcast %cst_19 : f32 to vector<1x256xf32>
    %46 = arith.select %43, %44, %45 : vector<1x256xi1>, vector<1x256xf32>
    %c240_i32_20 = arith.constant 240 : i32
    %47 = vector.broadcast %c240_i32_20 : i32 to vector<1x256xi32>
    %48 = arith.cmpi slt, %0, %47 : vector<1x256xi32>
    %c15_i32_21 = arith.constant 15 : i32
    %49 = vector.broadcast %c15_i32_21 : i32 to vector<1x256xi32>
    %50 = arith.cmpi slt, %2, %49 : vector<1x256xi32>
    %51 = arith.andi %48, %50 : vector<1x256xi1>
    %cst_22 = arith.constant 1.000000e+00 : f32
    %cst_23 = arith.constant 0.000000e+00 : f32
    %52 = vector.broadcast %cst_22 : f32 to vector<1x256xf32>
    %53 = vector.broadcast %cst_23 : f32 to vector<1x256xf32>
    %54 = arith.select %51, %52, %53 : vector<1x256xi1>, vector<1x256xf32>
    %c0 = arith.constant 0 : index
    %c0_24 = arith.constant 0 : index
    %55 = vector.load %arg0[%c0, %c0_24] : memref<8x256xf32, #tpu.memory_space<vmem>>, vector<8x256xf32>
    %cst_25 = arith.constant 0.000000e+00 : f32
    %56 = vector.broadcast %cst_25 : f32 to vector<8x256xf32>
    %57 = arith.maximumf %55, %56 : vector<8x256xf32>
    %58 = vector.extract_strided_slice %57 {offsets = [0, 239], sizes = [8, 17], strides = [1, 1]} : vector<8x256xf32> to vector<8x17xf32>
    %59 = vector.extract_strided_slice %57 {offsets = [0, 0], sizes = [8, 239], strides = [1, 1]} : vector<8x256xf32> to vector<8x239xf32>
    %60 = tpu.concatenate %58, %59 in 1 : vector<8x17xf32>, vector<8x239xf32> -> vector<8x256xf32>
    %61 = vector.broadcast %10 : vector<1x256xf32> to vector<8x256xf32>
    %62 = arith.mulf %60, %61 : vector<8x256xf32>
    %63 = vector.extract_strided_slice %57 {offsets = [0, 240], sizes = [8, 16], strides = [1, 1]} : vector<8x256xf32> to vector<8x16xf32>
    %64 = vector.extract_strided_slice %57 {offsets = [0, 0], sizes = [8, 240], strides = [1, 1]} : vector<8x256xf32> to vector<8x240xf32>
    %65 = tpu.concatenate %63, %64 in 1 : vector<8x16xf32>, vector<8x240xf32> -> vector<8x256xf32>
    %66 = vector.broadcast %15 : vector<1x256xf32> to vector<8x256xf32>
    %67 = arith.mulf %65, %66 : vector<8x256xf32>
    %68 = vector.extract_strided_slice %57 {offsets = [0, 241], sizes = [8, 15], strides = [1, 1]} : vector<8x256xf32> to vector<8x15xf32>
    %69 = vector.extract_strided_slice %57 {offsets = [0, 0], sizes = [8, 241], strides = [1, 1]} : vector<8x256xf32> to vector<8x241xf32>
    %70 = tpu.concatenate %68, %69 in 1 : vector<8x15xf32>, vector<8x241xf32> -> vector<8x256xf32>
    %71 = vector.broadcast %23 : vector<1x256xf32> to vector<8x256xf32>
    %72 = arith.mulf %70, %71 : vector<8x256xf32>
    %73 = vector.extract_strided_slice %57 {offsets = [0, 255], sizes = [8, 1], strides = [1, 1]} : vector<8x256xf32> to vector<8x1xf32>
    %74 = vector.extract_strided_slice %57 {offsets = [0, 0], sizes = [8, 255], strides = [1, 1]} : vector<8x256xf32> to vector<8x255xf32>
    %75 = tpu.concatenate %73, %74 in 1 : vector<8x1xf32>, vector<8x255xf32> -> vector<8x256xf32>
    %76 = vector.broadcast %28 : vector<1x256xf32> to vector<8x256xf32>
    %77 = arith.mulf %75, %76 : vector<8x256xf32>
    %78 = vector.extract_strided_slice %57 {offsets = [0, 1], sizes = [8, 255], strides = [1, 1]} : vector<8x256xf32> to vector<8x255xf32>
    %79 = vector.extract_strided_slice %57 {offsets = [0, 0], sizes = [8, 1], strides = [1, 1]} : vector<8x256xf32> to vector<8x1xf32>
    %80 = tpu.concatenate %78, %79 in 1 : vector<8x255xf32>, vector<8x1xf32> -> vector<8x256xf32>
    %81 = vector.broadcast %33 : vector<1x256xf32> to vector<8x256xf32>
    %82 = arith.mulf %80, %81 : vector<8x256xf32>
    %83 = vector.extract_strided_slice %57 {offsets = [0, 15], sizes = [8, 241], strides = [1, 1]} : vector<8x256xf32> to vector<8x241xf32>
    %84 = vector.extract_strided_slice %57 {offsets = [0, 0], sizes = [8, 15], strides = [1, 1]} : vector<8x256xf32> to vector<8x15xf32>
    %85 = tpu.concatenate %83, %84 in 1 : vector<8x241xf32>, vector<8x15xf32> -> vector<8x256xf32>
    %86 = vector.broadcast %41 : vector<1x256xf32> to vector<8x256xf32>
    %87 = arith.mulf %85, %86 : vector<8x256xf32>
    %88 = vector.extract_strided_slice %57 {offsets = [0, 16], sizes = [8, 240], strides = [1, 1]} : vector<8x256xf32> to vector<8x240xf32>
    %89 = vector.extract_strided_slice %57 {offsets = [0, 0], sizes = [8, 16], strides = [1, 1]} : vector<8x256xf32> to vector<8x16xf32>
    %90 = tpu.concatenate %88, %89 in 1 : vector<8x240xf32>, vector<8x16xf32> -> vector<8x256xf32>
    %91 = vector.broadcast %46 : vector<1x256xf32> to vector<8x256xf32>
    %92 = arith.mulf %90, %91 : vector<8x256xf32>
    %93 = vector.extract_strided_slice %57 {offsets = [0, 17], sizes = [8, 239], strides = [1, 1]} : vector<8x256xf32> to vector<8x239xf32>
    %94 = vector.extract_strided_slice %57 {offsets = [0, 0], sizes = [8, 17], strides = [1, 1]} : vector<8x256xf32> to vector<8x17xf32>
    %95 = tpu.concatenate %93, %94 in 1 : vector<8x239xf32>, vector<8x17xf32> -> vector<8x256xf32>
    %96 = vector.broadcast %54 : vector<1x256xf32> to vector<8x256xf32>
    %97 = arith.mulf %95, %96 : vector<8x256xf32>
    %cst_26 = arith.constant 0.000000e+00 : f32
    %98 = vector.broadcast %cst_26 : f32 to vector<56x256xf32>
    %99 = tpu.concatenate %62, %67, %72, %77, %57, %82, %87, %92, %97, %98 in 0 : vector<8x256xf32>, vector<8x256xf32>, vector<8x256xf32>, vector<8x256xf32>, vector<8x256xf32>, vector<8x256xf32>, vector<8x256xf32>, vector<8x256xf32>, vector<8x256xf32>, vector<56x256xf32> -> vector<128x256xf32>
    %c0_27 = arith.constant 0 : index
    %c0_28 = arith.constant 0 : index
    %100 = vector.load %arg1[%c0_27, %c0_28] : memref<8x128xf32, #tpu.memory_space<vmem>>, vector<8x128xf32>
    %cst_29 = arith.constant dense<0.000000e+00> : vector<8x256xf32>
    %101 = tpu.matmul %100, %99, %cst_29 {dimension_numbers = #tpu.dot_dimension_numbers<[1], [0], [0], [1], [0, 0, 1, 1], [], []>} : vector<8x128xf32>, vector<128x256xf32>, vector<8x256xf32> -> vector<8x256xf32>
    %c0_30 = arith.constant 0 : index
    %c0_31 = arith.constant 0 : index
    %102 = vector.load %arg2[%c0_30, %c0_31] : memref<8x1xf32, #tpu.memory_space<vmem>>, vector<8x1xf32>
    %103 = vector.broadcast %102 : vector<8x1xf32> to vector<8x256xf32>
    %104 = arith.addf %101, %103 : vector<8x256xf32>
    %cst_32 = arith.constant 0.000000e+00 : f32
    %105 = vector.broadcast %cst_32 : f32 to vector<8x256xf32>
    %106 = arith.maximumf %104, %105 : vector<8x256xf32>
    %107 = vector.extract_strided_slice %106 {offsets = [0, 239], sizes = [8, 17], strides = [1, 1]} : vector<8x256xf32> to vector<8x17xf32>
    %108 = vector.extract_strided_slice %106 {offsets = [0, 0], sizes = [8, 239], strides = [1, 1]} : vector<8x256xf32> to vector<8x239xf32>
    %109 = tpu.concatenate %107, %108 in 1 : vector<8x17xf32>, vector<8x239xf32> -> vector<8x256xf32>
    %110 = vector.broadcast %10 : vector<1x256xf32> to vector<8x256xf32>
    %111 = arith.mulf %109, %110 : vector<8x256xf32>
    %112 = vector.extract_strided_slice %106 {offsets = [0, 240], sizes = [8, 16], strides = [1, 1]} : vector<8x256xf32> to vector<8x16xf32>
    %113 = vector.extract_strided_slice %106 {offsets = [0, 0], sizes = [8, 240], strides = [1, 1]} : vector<8x256xf32> to vector<8x240xf32>
    %114 = tpu.concatenate %112, %113 in 1 : vector<8x16xf32>, vector<8x240xf32> -> vector<8x256xf32>
    %115 = vector.broadcast %15 : vector<1x256xf32> to vector<8x256xf32>
    %116 = arith.mulf %114, %115 : vector<8x256xf32>
    %117 = vector.extract_strided_slice %106 {offsets = [0, 241], sizes = [8, 15], strides = [1, 1]} : vector<8x256xf32> to vector<8x15xf32>
    %118 = vector.extract_strided_slice %106 {offsets = [0, 0], sizes = [8, 241], strides = [1, 1]} : vector<8x256xf32> to vector<8x241xf32>
    %119 = tpu.concatenate %117, %118 in 1 : vector<8x15xf32>, vector<8x241xf32> -> vector<8x256xf32>
    %120 = vector.broadcast %23 : vector<1x256xf32> to vector<8x256xf32>
    %121 = arith.mulf %119, %120 : vector<8x256xf32>
    %122 = vector.extract_strided_slice %106 {offsets = [0, 255], sizes = [8, 1], strides = [1, 1]} : vector<8x256xf32> to vector<8x1xf32>
    %123 = vector.extract_strided_slice %106 {offsets = [0, 0], sizes = [8, 255], strides = [1, 1]} : vector<8x256xf32> to vector<8x255xf32>
    %124 = tpu.concatenate %122, %123 in 1 : vector<8x1xf32>, vector<8x255xf32> -> vector<8x256xf32>
    %125 = vector.broadcast %28 : vector<1x256xf32> to vector<8x256xf32>
    %126 = arith.mulf %124, %125 : vector<8x256xf32>
    %127 = vector.extract_strided_slice %106 {offsets = [0, 1], sizes = [8, 255], strides = [1, 1]} : vector<8x256xf32> to vector<8x255xf32>
    %128 = vector.extract_strided_slice %106 {offsets = [0, 0], sizes = [8, 1], strides = [1, 1]} : vector<8x256xf32> to vector<8x1xf32>
    %129 = tpu.concatenate %127, %128 in 1 : vector<8x255xf32>, vector<8x1xf32> -> vector<8x256xf32>
    %130 = vector.broadcast %33 : vector<1x256xf32> to vector<8x256xf32>
    %131 = arith.mulf %129, %130 : vector<8x256xf32>
    %132 = vector.extract_strided_slice %106 {offsets = [0, 15], sizes = [8, 241], strides = [1, 1]} : vector<8x256xf32> to vector<8x241xf32>
    %133 = vector.extract_strided_slice %106 {offsets = [0, 0], sizes = [8, 15], strides = [1, 1]} : vector<8x256xf32> to vector<8x15xf32>
    %134 = tpu.concatenate %132, %133 in 1 : vector<8x241xf32>, vector<8x15xf32> -> vector<8x256xf32>
    %135 = vector.broadcast %41 : vector<1x256xf32> to vector<8x256xf32>
    %136 = arith.mulf %134, %135 : vector<8x256xf32>
    %137 = vector.extract_strided_slice %106 {offsets = [0, 16], sizes = [8, 240], strides = [1, 1]} : vector<8x256xf32> to vector<8x240xf32>
    %138 = vector.extract_strided_slice %106 {offsets = [0, 0], sizes = [8, 16], strides = [1, 1]} : vector<8x256xf32> to vector<8x16xf32>
    %139 = tpu.concatenate %137, %138 in 1 : vector<8x240xf32>, vector<8x16xf32> -> vector<8x256xf32>
    %140 = vector.broadcast %46 : vector<1x256xf32> to vector<8x256xf32>
    %141 = arith.mulf %139, %140 : vector<8x256xf32>
    %142 = vector.extract_strided_slice %106 {offsets = [0, 17], sizes = [8, 239], strides = [1, 1]} : vector<8x256xf32> to vector<8x239xf32>
    %143 = vector.extract_strided_slice %106 {offsets = [0, 0], sizes = [8, 17], strides = [1, 1]} : vector<8x256xf32> to vector<8x17xf32>
    %144 = tpu.concatenate %142, %143 in 1 : vector<8x239xf32>, vector<8x17xf32> -> vector<8x256xf32>
    %145 = vector.broadcast %54 : vector<1x256xf32> to vector<8x256xf32>
    %146 = arith.mulf %144, %145 : vector<8x256xf32>
    %cst_33 = arith.constant 0.000000e+00 : f32
    %147 = vector.broadcast %cst_33 : f32 to vector<56x256xf32>
    %148 = tpu.concatenate %111, %116, %121, %126, %106, %131, %136, %141, %146, %147 in 0 : vector<8x256xf32>, vector<8x256xf32>, vector<8x256xf32>, vector<8x256xf32>, vector<8x256xf32>, vector<8x256xf32>, vector<8x256xf32>, vector<8x256xf32>, vector<8x256xf32>, vector<56x256xf32> -> vector<128x256xf32>
    %c0_34 = arith.constant 0 : index
    %c0_35 = arith.constant 0 : index
    %149 = vector.load %arg3[%c0_34, %c0_35] : memref<8x128xf32, #tpu.memory_space<vmem>>, vector<8x128xf32>
    %cst_36 = arith.constant dense<0.000000e+00> : vector<8x256xf32>
    %150 = tpu.matmul %149, %148, %cst_36 {dimension_numbers = #tpu.dot_dimension_numbers<[1], [0], [0], [1], [0, 0, 1, 1], [], []>} : vector<8x128xf32>, vector<128x256xf32>, vector<8x256xf32> -> vector<8x256xf32>
    %c0_37 = arith.constant 0 : index
    %c0_38 = arith.constant 0 : index
    %151 = vector.load %arg4[%c0_37, %c0_38] : memref<8x1xf32, #tpu.memory_space<vmem>>, vector<8x1xf32>
    %152 = vector.broadcast %151 : vector<8x1xf32> to vector<8x256xf32>
    %153 = arith.addf %150, %152 : vector<8x256xf32>
    %154 = arith.addf %153, %55 : vector<8x256xf32>
    %c0_39 = arith.constant 0 : index
    %c0_40 = arith.constant 0 : index
    %155 = vector.load %arg5[%c0_39, %c0_40] : memref<8x256xf32, #tpu.memory_space<vmem>>, vector<8x256xf32>
    tpu.vector_store %arg5[%c0_39, %c0_40], %154 {strides = array<i32>} : memref<8x256xf32, #tpu.memory_space<vmem>>, vector<8x256xf32>,
    return
  }
}

</mosaic_0001>

<llo_original>
// kernel: tile.13
$region0: #{tile.13}
  #allocation0 [shape = 's32[1]{0}', space=sflag, size = 0x4, scoped, tag = 'scoped memory for tile.13']
  %s0 = inlined_call_operand.vmem [shape: f32[4], index: 0, kind: input, shape index: {}]
  %s1 = inlined_call_operand.vmem [shape: f32[2,4], index: 1, kind: output, shape index: {}]
  // Predicated region
  $region2: #{tile.13} parent=0 // pred_check
    _
  $region3: #{tile.13} parent=0 // pred_check_branch
    %3 = sbr.rel (0) target = $region5
  $region4: #{tile.13} parent=0 // pred_region
    _
  $region5: #{tile.13} parent=0 // pred_fallthru
    _
  %v4 = vld [vmem:[%s0] ss:$0 sm:$0xff]
  %5 = vst [vmem:[%s1] sm:$0x3] %v4

// kernel: tile.0
$region0: #{tile.0}
  %s0 = inlined_call_operand.vmem [shape: f32[2,4], index: 0, kind: input, shape index: {}]
  %s1 = inlined_call_operand.vmem [shape: f32[8,1], index: 1, kind: output, shape index: {}]
  $region1: #{tile.0} parent=0
    #allocation0 [shape = 'u8[4096]{0}', space=vmem, size = 0x1000, scoped, tag = 'scoped mem for input reshape']
    %s3 = sshllo.u32 0, 2
    %v4 = vld [vmem:[%s0] sm:%s3]
    %5 = vst [vmem:[#allocation0] sm:%s3] %v4
    %v6 = vld [vmem:[#allocation0] sm:$0x3]
    %vm7 = vcmask 7168
    %8 = vst.msk [vmem:[%s1] ss:$4 sm:$0x3] %vm7, %v6
    %v9 = vld [vmem:[#allocation0] sm:$0x3]
    %10 = vrot.lane.b32.xlu0 %v9, 127
    %v11 = vpop.permute.xlu0 %10
    %vm12 = vcmask 7168
    %s13 = scalar_lea.vmem %s1, 1
    %14 = vst.msk [vmem:[%s13] ss:$4 sm:$0x3] %vm12, %v11
    %v15 = vld [vmem:[#allocation0] sm:$0x3]
    %16 = vrot.lane.b32.xlu0 %v15, 126
    %v17 = vpop.permute.xlu0 %16
    %vm18 = vcmask 7168
    %s19 = scalar_lea.vmem %s1, 2
    %20 = vst.msk [vmem:[%s19] ss:$4 sm:$0x3] %vm18, %v17
    %v21 = vld [vmem:[#allocation0] sm:$0x3]
    %22 = vrot.lane.b32.xlu0 %v21, 125
    %v23 = vpop.permute.xlu0 %22
    %vm24 = vcmask 7168
    %s25 = scalar_lea.vmem %s1, 3
    %26 = vst.msk [vmem:[%s25] ss:$4 sm:$0x3] %vm24, %v23

// kernel: lateral_block.1
$region0: #{lateral_block.1}
  #allocation0 [shape = 'u32[]', space=smem, size = 0x4, offset = 0x4, fixed_abs, tag = 'smem constant byte address 0x4 - core index']
  #allocation1 [shape = 'u32[144,128]{1,0:T(1,128)}', space=vmem, size = 0x12000, scoped, tag = 'internal scratch']
  %s0 = inlined_call_operand.vmem [shape: f32[8,256], index: 0, kind: input, shape index: {}]
  %s1 = inlined_call_operand.vmem [shape: f32[8,128], index: 1, kind: input, shape index: {}]
  %s2 = inlined_call_operand.vmem [shape: f32[8,1], index: 2, kind: input, shape index: {}]
  %s3 = inlined_call_operand.vmem [shape: f32[8,128], index: 3, kind: input, shape index: {}]
  %s4 = inlined_call_operand.vmem [shape: f32[8,1], index: 4, kind: input, shape index: {}]
  %s5 = inlined_call_operand.vmem [shape: f32[8,256], index: 5, kind: output, shape index: {}]
  %s6 = sld [smem:[#allocation0]]
  $region30: #{lateral_block.1} parent=0
    _
  %s8 = ssub.s32 1, %s6
  %s9 = scalar_select 0, %s8, %s6
  // Predicated region
  $region2: #{lateral_block.1} parent=0 // pred_check
    _
  $region3: #{lateral_block.1} parent=0 // pred_check_branch
    %11 = sbr.rel (0) target = $region5
  $region4: #{lateral_block.1} parent=0 // pred_region
    _
  $region5: #{lateral_block.1} parent=0 // pred_fallthru
    _
  // Predicated region
  $region6: #{lateral_block.1} parent=0 // pred_check
    _
  $region7: #{lateral_block.1} parent=0 // pred_check_branch
    %13 = sbr.rel (0) target = $region9
  $region8: #{lateral_block.1} parent=0 // pred_region
    _
  $region9: #{lateral_block.1} parent=0 // pred_fallthru
    _
  // Predicated region
  $region10: #{lateral_block.1} parent=0 // pred_check
    _
  $region11: #{lateral_block.1} parent=0 // pred_check_branch
    %15 = sbr.rel (0) target = $region13
  $region12: #{lateral_block.1} parent=0 // pred_region
    _
  $region13: #{lateral_block.1} parent=0 // pred_fallthru
    _
  // Predicated region
  $region14: #{lateral_block.1} parent=0 // pred_check
    _
  $region15: #{lateral_block.1} parent=0 // pred_check_branch
    %17 = sbr.rel (0) target = $region17
  $region16: #{lateral_block.1} parent=0 // pred_region
    _
  $region17: #{lateral_block.1} parent=0 // pred_fallthru
    _
  // Predicated region
  $region18: #{lateral_block.1} parent=0 // pred_check
    _
  $region19: #{lateral_block.1} parent=0 // pred_check_branch
    %19 = sbr.rel (0) target = $region21
  $region20: #{lateral_block.1} parent=0 // pred_region
    _
  $region21: #{lateral_block.1} parent=0 // pred_fallthru
    _
  %v20 = vlaneseq
  %v21 = vand.u32 %v20, 127
  %v22 = vadd.s32 %v21, 128
  %v23 = vand.u32 %v21, 15
  %v24 = vand.u32 %v22, 15
  %vm25 = vcmp.ge.s32.totalorder %v21, 16
  %vm26 = vcmp.ge.s32.totalorder %v22, 16
  %vm27 = vcmp.ge.s32.totalorder %v23, 1
  %vm28 = vcmp.ge.s32.totalorder %v24, 1
  %vm29 = vmand %vm25, %vm27
  %vm30 = vmand %vm26, %vm28
  %v31 = vsel %vm29, 1.0, 0.0
  %v32 = vsel %vm30, 1.0, 0.0
  %v33 = vsel %vm25, 1.0, 0.0
  %v34 = vsel %vm26, 1.0, 0.0
  %vm35 = vcmp.lt.s32.totalorder %v23, 15
  %vm36 = vcmp.lt.s32.totalorder %v24, 15
  %vm37 = vmand %vm25, %vm35
  %vm38 = vmand %vm26, %vm36
  %v39 = vsel %vm37, 1.0, 0.0
  %v40 = vsel %vm38, 1.0, 0.0
  %v41 = vsel %vm27, 1.0, 0.0
  %v42 = vsel %vm28, 1.0, 0.0
  %v43 = vsel %vm35, 1.0, 0.0
  %v44 = vsel %vm36, 1.0, 0.0
  %vm45 = vcmp.lt.s32.totalorder %v21, 240
  %vm46 = vcmp.lt.s32.totalorder %v22, 240
  %vm47 = vmand %vm45, %vm27
  %vm48 = vmand %vm46, %vm28
  %v49 = vsel %vm47, 1.0, 0.0
  %v50 = vsel %vm48, 1.0, 0.0
  %v51 = vsel %vm45, 1.0, 0.0
  %v52 = vsel %vm46, 1.0, 0.0
  %vm53 = vmand %vm45, %vm35
  %vm54 = vmand %vm46, %vm36
  %v55 = vsel %vm53, 1.0, 0.0
  %v56 = vsel %vm54, 1.0, 0.0
  %v57 = vld [vmem:[%s0] sm:$0xff]
  %v58 = vld [vmem:[%s0 + $0x8] sm:$0xff]
  %v59 = vmax.f32 %v57, 0.0
  %v60 = vmax.f32 %v58, 0.0
  %62 = vrot.lane.b32.xlu0 %v60, 17
  %v63 = vpop.permute.xlu0 %62
  %66 = vrot.lane.b32.xlu0 %v59, 17
  %v67 = vpop.permute.xlu0 %66
  %vm68 = vcmask 138240
  %v69 = vsel %vm68, %v67, %v63
  %v72 = vsel %vm68, %v63, %v67
  %v73 = vmul.f32 %v72, %v31
  %v74 = vmul.f32 %v69, %v32
  %75 = vrot.lane.b32.xlu0 %v60, 16
  %v76 = vpop.permute.xlu0 %75
  %78 = vrot.lane.b32.xlu0 %v59, 16
  %v79 = vpop.permute.xlu0 %78
  %vm80 = vcmask 130048
  %v81 = vsel %vm80, %v79, %v76
  %v84 = vsel %vm80, %v76, %v79
  %v85 = vmul.f32 %v84, %v33
  %v86 = vmul.f32 %v81, %v34
  %87 = vrot.lane.b32.xlu0 %v60, 15
  %v88 = vpop.permute.xlu0 %87
  %90 = vrot.lane.b32.xlu0 %v59, 15
  %v91 = vpop.permute.xlu0 %90
  %vm92 = vcmask 121856
  %v93 = vsel %vm92, %v91, %v88
  %v96 = vsel %vm92, %v88, %v91
  %v97 = vmul.f32 %v96, %v39
  %v98 = vmul.f32 %v93, %v40
  %99 = vrot.lane.b32.xlu0 %v60, 1
  %v100 = vpop.permute.xlu0 %99
  %102 = vrot.lane.b32.xlu0 %v59, 1
  %v103 = vpop.permute.xlu0 %102
  %vm104 = vcmask 7168
  %v105 = vsel %vm104, %v103, %v100
  %v108 = vsel %vm104, %v100, %v103
  %v109 = vmul.f32 %v108, %v41
  %v110 = vmul.f32 %v105, %v42
  %111 = vrot.lane.b32.xlu0 %v59, 127
  %v112 = vpop.permute.xlu0 %111
  %113 = vrot.lane.b32.xlu0 %v60, 127
  %v114 = vpop.permute.xlu0 %113
  %vm115 = vcmask 1039360
  %v116 = vsel %vm115, %v112, %v114
  %v120 = vsel %vm115, %v114, %v112
  %v121 = vmul.f32 %v116, %v43
  %v122 = vmul.f32 %v120, %v44
  %123 = vrot.lane.b32.xlu0 %v59, 113
  %v124 = vpop.permute.xlu0 %123
  %125 = vrot.lane.b32.xlu0 %v60, 113
  %v126 = vpop.permute.xlu0 %125
  %vm127 = vcmask 924672
  %v128 = vsel %vm127, %v124, %v126
  %v132 = vsel %vm127, %v126, %v124
  %v133 = vmul.f32 %v128, %v49
  %v134 = vmul.f32 %v132, %v50
  %135 = vrot.lane.b32.xlu0 %v59, 112
  %v136 = vpop.permute.xlu0 %135
  %137 = vrot.lane.b32.xlu0 %v60, 112
  %v138 = vpop.permute.xlu0 %137
  %vm139 = vcmask 916480
  %v140 = vsel %vm139, %v136, %v138
  %v144 = vsel %vm139, %v138, %v136
  %v145 = vmul.f32 %v140, %v51
  %v146 = vmul.f32 %v144, %v52
  %147 = vrot.lane.b32.xlu0 %v59, 111
  %v148 = vpop.permute.xlu0 %147
  %149 = vrot.lane.b32.xlu0 %v60, 111
  %v150 = vpop.permute.xlu0 %149
  %vm151 = vcmask 908288
  %v152 = vsel %vm151, %v148, %v150
  %v156 = vsel %vm151, %v150, %v148
  %v157 = vmul.f32 %v152, %v55
  %v158 = vmul.f32 %v156, %v56
  %v159 = vld [vmem:[%s1] sm:$0xff]
  %v160 = vld [vmem:[%s2] sm:$0xff]
  %162 = vset.pattern.permute.xlu0 0
  %163 = vperm.xlu0 %162, %v160
  %v164 = vpop.permute.xlu0 %163
  %166 = vmatprep.subr.mxu0 %v74
  %167 = vmatpush1.msra.mxu0 %v73
  %168 = vmatprep.subr.mxu0 %v86
  %169 = vmatpush1.msra.mxu0 %v85
  %170 = vmatprep.subr.mxu0 %v98
  %171 = vmatpush1.msra.mxu0 %v97
  %172 = vmatprep.subr.mxu0 %v110
  %173 = vmatpush1.msra.mxu0 %v109
  %174 = vmatprep.subr.mxu0 %v60
  %175 = vmatpush1.msra.mxu0 %v59
  %176 = vmatprep.subr.mxu0 %v122
  %177 = vmatpush1.msra.mxu0 %v121
  %178 = vmatprep.subr.mxu0 %v134
  %179 = vmatpush1.msra.mxu0 %v133
  %180 = vmatprep.subr.mxu0 %v146
  %181 = vmatpush1.msra.mxu0 %v145
  %182 = vmatprep.subr.mxu0 %v158
  %183 = vmatpush1.msra.mxu0 %v157
  %184 = vmatprep.subr.mxu0 0.0
  %185 = vmatpush1.msra.mxu0 0.0
  %186 = vmatprep.subr.mxu0 0.0
  %187 = vmatpush1.msra.mxu0 0.0
  %188 = vmatprep.subr.mxu0 0.0
  %189 = vmatpush1.msra.mxu0 0.0
  %190 = vmatprep.subr.mxu0 0.0
  %191 = vmatpush1.msra.mxu0 0.0
  %192 = vmatprep.subr.mxu0 0.0
  %193 = vmatpush1.msra.mxu0 0.0
  %194 = vmatprep.subr.mxu0 0.0
  %195 = vmatpush1.msra.mxu0 0.0
  %196 = vmatprep.subr.mxu0 0.0
  %197 = vmatpush1.msra.mxu0 0.0
  %198 = vmatprep.subr.mxu0 0.0
  %199 = vmatpush1.msra.mxu0 0.0
  %200 = vmatprep.subr.mxu0 0.0
  %201 = vmatpush1.msra.mxu0 0.0
  %202 = vmatprep.subr.mxu0 0.0
  %203 = vmatpush1.msra.mxu0 0.0
  %204 = vmatprep.subr.mxu0 0.0
  %205 = vmatpush1.msra.mxu0 0.0
  %206 = vmatprep.subr.mxu0 0.0
  %207 = vmatpush1.msra.mxu0 0.0
  %208 = vmatprep.subr.mxu0 0.0
  %209 = vmatpush1.msra.mxu0 0.0
  %210 = vmatprep.subr.mxu0 0.0
  %211 = vmatpush1.msra.mxu0 0.0
  %212 = vmatprep.subr.mxu0 0.0
  %213 = vmatpush1.msra.mxu0 0.0
  %214 = vmatprep.subr.mxu0 0.0
  %215 = vmatpush1.msra.mxu0 0.0
  %216 = vmatprep.subr.mxu0 0.0
  %217 = vmatpush1.msra.mxu0 0.0
  %218 = vmatprep.subr.mxu0 0.0
  %219 = vmatpush1.msra.mxu0 0.0
  %220 = vmatprep.subr.mxu0 0.0
  %221 = vmatpush1.msra.mxu0 0.0
  %222 = vmatprep.subr.mxu0 0.0
  %223 = vmatpush1.msra.mxu0 0.0
  %224 = vmatprep.subr.mxu0 0.0
  %225 = vmatpush1.msra.mxu0 0.0
  %226 = vmatprep.subr.mxu0 0.0
  %227 = vmatpush1.msra.mxu0 0.0
  %228 = vmatprep.subr.mxu0 0.0
  %229 = vmatpush1.msra.mxu0 0.0
  %230 = vmatprep.mubr.f32.mxu0 0.0
  %231 = vmatmul.mubr.f32.gmra.mrb[0].mxu0 %v159
  %v232 = vpop.f32.mrb[0].mxu0
  %v233 = vadd.f32 %v164, %v232
  %v234 = vpop.f32.mrb[0].mxu0
  %v235 = vadd.f32 %v164, %v234
  %236 = vdwg.mxu0
  %v237 = vmax.f32 %v233, 0.0
  %v238 = vmax.f32 %v235, 0.0
  %240 = vrot.lane.b32.xlu0 %v238, 17
  %v241 = vpop.permute.xlu0 %240
  %244 = vrot.lane.b32.xlu0 %v237, 17
  %v245 = vpop.permute.xlu0 %244
  %v246 = vsel %vm68, %v245, %v241
  %v249 = vsel %vm68, %v241, %v245
  %v250 = vmul.f32 %v249, %v31
  %v251 = vmul.f32 %v246, %v32
  %252 = vrot.lane.b32.xlu0 %v238, 16
  %v253 = vpop.permute.xlu0 %252
  %255 = vrot.lane.b32.xlu0 %v237, 16
  %v256 = vpop.permute.xlu0 %255
  %v257 = vsel %vm80, %v256, %v253
  %v260 = vsel %vm80, %v253, %v256
  %v261 = vmul.f32 %v260, %v33
  %v262 = vmul.f32 %v257, %v34
  %263 = vrot.lane.b32.xlu0 %v238, 15
  %v264 = vpop.permute.xlu0 %263
  %266 = vrot.lane.b32.xlu0 %v237, 15
  %v267 = vpop.permute.xlu0 %266
  %v268 = vsel %vm92, %v267, %v264
  %v271 = vsel %vm92, %v264, %v267
  %v272 = vmul.f32 %v271, %v39
  %v273 = vmul.f32 %v268, %v40
  %274 = vrot.lane.b32.xlu0 %v238, 1
  %v275 = vpop.permute.xlu0 %274
  %277 = vrot.lane.b32.xlu0 %v237, 1
  %v278 = vpop.permute.xlu0 %277
  %v279 = vsel %vm104, %v278, %v275
  %v282 = vsel %vm104, %v275, %v278
  %v283 = vmul.f32 %v282, %v41
  %v284 = vmul.f32 %v279, %v42
  %285 = vrot.lane.b32.xlu0 %v237, 127
  %v286 = vpop.permute.xlu0 %285
  %287 = vrot.lane.b32.xlu0 %v238, 127
  %v288 = vpop.permute.xlu0 %287
  %v289 = vsel %vm115, %v286, %v288
  %v293 = vsel %vm115, %v288, %v286
  %v294 = vmul.f32 %v289, %v43
  %v295 = vmul.f32 %v293, %v44
  %296 = vrot.lane.b32.xlu0 %v237, 113
  %v297 = vpop.permute.xlu0 %296
  %298 = vrot.lane.b32.xlu0 %v238, 113
  %v299 = vpop.permute.xlu0 %298
  %v300 = vsel %vm127, %v297, %v299
  %v304 = vsel %vm127, %v299, %v297
  %v305 = vmul.f32 %v300, %v49
  %v306 = vmul.f32 %v304, %v50
  %307 = vrot.lane.b32.xlu0 %v237, 112
  %v308 = vpop.permute.xlu0 %307
  %309 = vrot.lane.b32.xlu0 %v238, 112
  %v310 = vpop.permute.xlu0 %309
  %v311 = vsel %vm139, %v308, %v310
  %v315 = vsel %vm139, %v310, %v308
  %v316 = vmul.f32 %v311, %v51
  %v317 = vmul.f32 %v315, %v52
  %318 = vrot.lane.b32.xlu0 %v237, 111
  %v319 = vpop.permute.xlu0 %318
  %320 = vrot.lane.b32.xlu0 %v238, 111
  %v321 = vpop.permute.xlu0 %320
  %v322 = vsel %vm151, %v319, %v321
  %v326 = vsel %vm151, %v321, %v319
  %v327 = vmul.f32 %v322, %v55
  %v328 = vmul.f32 %v326, %v56
  %v329 = vld [vmem:[%s3] sm:$0xff]
  %v330 = vld [vmem:[%s4] sm:$0xff]
  %332 = vset.pattern.permute.xlu0 0
  %333 = vperm.xlu0 %332, %v330
  %v334 = vpop.permute.xlu0 %333
  %336 = vmatprep.subr.mxu0 %v251
  %337 = vmatpush1.msra.mxu0 %v250
  %338 = vmatprep.subr.mxu0 %v262
  %339 = vmatpush1.msra.mxu0 %v261
  %340 = vmatprep.subr.mxu0 %v273
  %341 = vmatpush1.msra.mxu0 %v272
  %342 = vmatprep.subr.mxu0 %v284
  %343 = vmatpush1.msra.mxu0 %v283
  %344 = vmatprep.subr.mxu0 %v238
  %345 = vmatpush1.msra.mxu0 %v237
  %346 = vmatprep.subr.mxu0 %v295
  %347 = vmatpush1.msra.mxu0 %v294
  %348 = vmatprep.subr.mxu0 %v306
  %349 = vmatpush1.msra.mxu0 %v305
  %350 = vmatprep.subr.mxu0 %v317
  %351 = vmatpush1.msra.mxu0 %v316
  %352 = vmatprep.subr.mxu0 %v328
  %353 = vmatpush1.msra.mxu0 %v327
  %354 = vmatprep.subr.mxu0 0.0
  %355 = vmatpush1.msra.mxu0 0.0
  %356 = vmatprep.subr.mxu0 0.0
  %357 = vmatpush1.msra.mxu0 0.0
  %358 = vmatprep.subr.mxu0 0.0
  %359 = vmatpush1.msra.mxu0 0.0
  %360 = vmatprep.subr.mxu0 0.0
  %361 = vmatpush1.msra.mxu0 0.0
  %362 = vmatprep.subr.mxu0 0.0
  %363 = vmatpush1.msra.mxu0 0.0
  %364 = vmatprep.subr.mxu0 0.0
  %365 = vmatpush1.msra.mxu0 0.0
  %366 = vmatprep.subr.mxu0 0.0
  %367 = vmatpush1.msra.mxu0 0.0
  %368 = vmatprep.subr.mxu0 0.0
  %369 = vmatpush1.msra.mxu0 0.0
  %370 = vmatprep.subr.mxu0 0.0
  %371 = vmatpush1.msra.mxu0 0.0
  %372 = vmatprep.subr.mxu0 0.0
  %373 = vmatpush1.msra.mxu0 0.0
  %374 = vmatprep.subr.mxu0 0.0
  %375 = vmatpush1.msra.mxu0 0.0
  %376 = vmatprep.subr.mxu0 0.0
  %377 = vmatpush1.msra.mxu0 0.0
  %378 = vmatprep.subr.mxu0 0.0
  %379 = vmatpush1.msra.mxu0 0.0
  %380 = vmatprep.subr.mxu0 0.0
  %381 = vmatpush1.msra.mxu0 0.0
  %382 = vmatprep.subr.mxu0 0.0
  %383 = vmatpush1.msra.mxu0 0.0
  %384 = vmatprep.subr.mxu0 0.0
  %385 = vmatpush1.msra.mxu0 0.0
  %386 = vmatprep.subr.mxu0 0.0
  %387 = vmatpush1.msra.mxu0 0.0
  %388 = vmatprep.subr.mxu0 0.0
  %389 = vmatpush1.msra.mxu0 0.0
  %390 = vmatprep.subr.mxu0 0.0
  %391 = vmatpush1.msra.mxu0 0.0
  %392 = vmatprep.subr.mxu0 0.0
  %393 = vmatpush1.msra.mxu0 0.0
  %394 = vmatprep.subr.mxu0 0.0
  %395 = vmatpush1.msra.mxu0 0.0
  %396 = vmatprep.subr.mxu0 0.0
  %397 = vmatpush1.msra.mxu0 0.0
  %398 = vmatprep.subr.mxu0 0.0
  %399 = vmatpush1.msra.mxu0 0.0
  %400 = vmatprep.mubr.f32.mxu0 0.0
  %401 = vmatmul.mubr.f32.gmra.mrb[0].mxu0 %v329
  %v402 = vpop.f32.mrb[0].mxu0
  %v403 = vadd.f32 %v334, %v402
  %v404 = vpop.f32.mrb[0].mxu0
  %v405 = vadd.f32 %v334, %v404
  %406 = vdwg.mxu0
  %v407 = vadd.f32 %v403, %v57
  %v408 = vadd.f32 %v405, %v58
  %409 = vst [vmem:[%s5] sm:$0xff] %v407
  %410 = vst [vmem:[%s5 + $0x8] sm:$0xff] %v408
  // Predicated region
  $region22: #{lateral_block.1} parent=0 // pred_check
    _
  $region23: #{lateral_block.1} parent=0 // pred_check_branch
    %412 = sbr.rel (0) target = $region25
  $region24: #{lateral_block.1} parent=0 // pred_region
    _
  $region25: #{lateral_block.1} parent=0 // pred_fallthru
    _
  // Predicated region
  $region26: #{lateral_block.1} parent=0 // pred_check
    _
  $region27: #{lateral_block.1} parent=0 // pred_check_branch
    %414 = sbr.rel (0) target = $region29
  $region28: #{lateral_block.1} parent=0 // pred_region
    _
  $region29: #{lateral_block.1} parent=0 // pred_fallthru
    _

</llo_original>
